<compile_context>
chip_gen: v6e
topology: v6e:2x2x1
jax: 0.10.0
libtpu: 0.0.40
codegen_flags: <defaults>
</compile_context>

<pallas_src>
import jax
import jax.numpy as jnp
from jax.experimental import pallas as pl
from jax.experimental.pallas import tpu as pltpu


def _attn_out_kernel(x_ref, w_ref, b_ref, o_ref, acc_ref):
    # x_ref : (tm, d_head)   one head's activations for a (batch, row-tile)
    # w_ref : (d_head, tn)   matching K-slice of W in (in, out) layout
    # b_ref : (1, tn)
    # o_ref : (tm, tn)
    # acc_ref: (tm, tn) f32 scratch, resident across the head/K grid axis
    k = pl.program_id(3)

    @pl.when(k == 0)
    def _():
        acc_ref[...] = jnp.zeros_like(acc_ref)

    acc_ref[...] += jnp.dot(x_ref[...], w_ref[...],
                            preferred_element_type=jnp.float32)

    @pl.when(k == pl.num_programs(3) - 1)
    def _():
        o_ref[...] = (acc_ref[...] + b_ref[...]).astype(o_ref.dtype)


def _pick_tile(dim, preferred, align):
    """Largest align-multiple tile <= preferred that divides dim, else full dim."""
    if dim <= preferred:
        return dim
    t = (preferred // align) * align
    while t >= align:
        if dim % t == 0:
            return t
        t -= align
    return dim  # full extent is always a legal block


def prepare_attention_output_params(weight):
    """One-time prep: PyTorch Linear weight (out, in) -> (in, out) so y = x @ W + b."""
    return jnp.asarray(weight).T


def compute_attention_output(x, w_in_out, bias, n_heads=1,
                             tm_target=512, tn_target=512):
    """x: (batch*n_heads, seqlen, d_head).
    w_in_out: (d_model, d_model) pre-transposed to (in, out) layout.
    bias: (d_model,). Returns (batch, seqlen, d_model)."""
    bh, seqlen, d_head = x.shape
    assert bh % n_heads == 0
    batch = bh // n_heads
    d_model = n_heads * d_head
    assert w_in_out.shape == (d_model, d_model)
    assert bias.shape == (d_model,)

    tm = _pick_tile(seqlen, tm_target, 8)      # row tile (sublane-aligned)
    tn = _pick_tile(d_model, tn_target, 128)   # lane-dense output tile
    n_i = seqlen // tm
    n_j = d_model // tn

    b2d = bias.reshape(1, d_model)

    # Head merge folded into BlockSpec index arithmetic: for grid point
    # (b, i, j, k) the x block is x[b*n_heads + k, i*tm:(i+1)*tm, :] and the
    # weight block is w_in_out[k*d_head:(k+1)*d_head, j*tn:(j+1)*tn].
    x_spec = pl.BlockSpec((None, tm, d_head),
                          lambda b, i, j, k: (b * n_heads + k, i, 0))
    w_spec = pl.BlockSpec((d_head, tn), lambda b, i, j, k: (k, j))
    b_spec = pl.BlockSpec((1, tn), lambda b, i, j, k: (0, j))
    o_spec = pl.BlockSpec((None, tm, tn), lambda b, i, j, k: (b, i, j))

    # VMEM budget: double-buffered tiles + accumulator, with headroom.
    tile_bytes = 4 * (tm * d_head + d_head * tn + tn + tm * tn)
    vmem_limit = int(min(96 * 2**20, max(16 * 2**20, 4 * tile_bytes)))

    cost = pl.CostEstimate(
        flops=2 * batch * seqlen * d_model * d_model,
        bytes_accessed=4 * (2 * batch * seqlen * d_model        # x read + y write
                            + n_i * batch * d_model * d_model   # weight re-reads
                            + d_model),
        transcendentals=0,
    )

    out = pl.pallas_call(
        _attn_out_kernel,
        out_shape=jax.ShapeDtypeStruct((batch, seqlen, d_model), x.dtype),
        grid_spec=pltpu.PrefetchScalarGridSpec(
            num_scalar_prefetch=0,
            grid=(batch, n_i, n_j, n_heads),        # reduction (heads) last
            in_specs=[x_spec, w_spec, b_spec],
            out_specs=o_spec,
            scratch_shapes=[pltpu.VMEM((tm, tn), jnp.float32)],
        ),
        compiler_params=pltpu.CompilerParams(
            dimension_semantics=("parallel", "parallel", "parallel", "arbitrary"),
            vmem_limit_bytes=vmem_limit,
        ),
        cost_estimate=cost,
    )(x, w_in_out, b2d)
    return out


if __name__ == "__main__":
    # Small shapes implied by the forward: (batch*n_heads, seqlen, d_head)
    n_heads = 2
    batch, seqlen, d_head = 2, 8, 16
    d_model = n_heads * d_head

    key = jax.random.PRNGKey(0)
    kx, kw, kb = jax.random.split(key, 3)

    x = jax.random.normal(kx, (batch * n_heads, seqlen, d_head), dtype=jnp.float32)
    # Deterministic "Linear" parameters (PyTorch layout: weight (out, in), bias (out,))
    weight = jax.random.normal(kw, (d_model, d_model), dtype=jnp.float32) * (1.0 / d_model ** 0.5)
    bias = jax.random.normal(kb, (d_model,), dtype=jnp.float32) * 0.01

    w_in_out = prepare_attention_output_params(weight)   # one-time, off the hot path
    out = compute_attention_output(x, w_in_out, bias, n_heads=n_heads)
    jax.block_until_ready(out)

    # Pure-JAX reference (same head-merge + linear as the PyTorch module).
    xh = (x.reshape(batch, n_heads, seqlen, d_head)
            .transpose(0, 2, 1, 3)
            .reshape(batch, seqlen, d_model))
    ref = xh @ weight.T + bias
    assert out.shape == (batch, seqlen, d_model)
    assert jnp.allclose(out, ref, atol=1e-4, rtol=1e-4)

    print("KERNEL_OK")
</pallas_src>

<mosaic_0001>
module attributes {stable_mosaic.version = 11 : i64} {
  func.func @_attn_out_kernel(%arg0: i32, %arg1: i32, %arg2: i32, %arg3: i32, %arg4: memref<1x8x16xf32, #tpu.memory_space<vmem>>, %arg5: memref<16x32xf32, #tpu.memory_space<vmem>>, %arg6: memref<1x32xf32, #tpu.memory_space<vmem>>, %arg7: memref<1x8x32xf32, #tpu.memory_space<vmem>>, %arg8: memref<8x32xf32, #tpu.memory_space<vmem>>) attributes {dimension_semantics = [#tpu.dimension_semantics<parallel>, #tpu.dimension_semantics<parallel>, #tpu.dimension_semantics<parallel>, #tpu.dimension_semantics<arbitrary>], iteration_bounds = array<i64: 2, 1, 1, 2>, scalar_prefetch = 0 : i64, scratch_operands = 1 : i64, tpu.core_type = #tpu.core_type<tc>, window_params = [{transform_indices = @transform_0, window_bounds = array<i64: 1, 8, 16>}, {transform_indices = @transform_1, window_bounds = array<i64: 16, 32>}, {transform_indices = @transform_2, window_bounds = array<i64: 1, 32>}, {transform_indices = @transform_3, window_bounds = array<i64: 1, 8, 32>}]} {
    %c0_i32 = arith.constant 0 : i32
    %0 = arith.cmpi eq, %arg3, %c0_i32 : i32
    %1 = arith.extui %0 : i1 to i32
    %c0_i32_0 = arith.constant 0 : i32
    %2 = arith.cmpi ne, %1, %c0_i32_0 : i32
    scf.if %2 {
      %cst_10 = arith.constant 0.000000e+00 : f32
      %13 = vector.broadcast %cst_10 : f32 to vector<8x32xf32>
      %c0_11 = arith.constant 0 : index
      %c0_12 = arith.constant 0 : index
      %14 = vector.load %arg8[%c0_11, %c0_12] : memref<8x32xf32, #tpu.memory_space<vmem>>, vector<8x32xf32>
      tpu.vector_store %arg8[%c0_11, %c0_12], %13 {strides = array<i32>} : memref<8x32xf32, #tpu.memory_space<vmem>>, vector<8x32xf32>,
    } else {
    }
    %c0 = arith.constant 0 : index
    %c0_1 = arith.constant 0 : index
    %3 = vector.load %arg8[%c0, %c0_1] : memref<8x32xf32, #tpu.memory_space<vmem>>, vector<8x32xf32>
    %c0_2 = arith.constant 0 : index
    %c0_3 = arith.constant 0 : index
    %c0_4 = arith.constant 0 : index
    %4 = vector.load %arg4[%c0_2, %c0_3, %c0_4] : memref<1x8x16xf32, #tpu.memory_space<vmem>>, vector<1x8x16xf32>
    %5 = vector.shape_cast %4 : vector<1x8x16xf32> to vector<8x16xf32>
    %c0_5 = arith.constant 0 : index
    %c0_6 = arith.constant 0 : index
    %6 = vector.load %arg5[%c0_5, %c0_6] : memref<16x32xf32, #tpu.memory_space<vmem>>, vector<16x32xf32>
    %cst = arith.constant dense<0.000000e+00> : vector<8x32xf32>
    %7 = tpu.matmul %5, %6, %cst {dimension_numbers = #tpu.dot_dimension_numbers<[1], [0], [0], [1], [0, 0, 1, 1], [], []>} : vector<8x16xf32>, vector<16x32xf32>, vector<8x32xf32> -> vector<8x32xf32>
    %8 = arith.addf %3, %7 : vector<8x32xf32>
    %c0_7 = arith.constant 0 : index
    %c0_8 = arith.constant 0 : index
    %9 = vector.load %arg8[%c0_7, %c0_8] : memref<8x32xf32, #tpu.memory_space<vmem>>, vector<8x32xf32>
    tpu.vector_store %arg8[%c0_7, %c0_8], %8 {strides = array<i32>} : memref<8x32xf32, #tpu.memory_space<vmem>>, vector<8x32xf32>,
    %c1_i32 = arith.constant 1 : i32
    %10 = arith.cmpi eq, %arg3, %c1_i32 : i32
    %11 = arith.extui %10 : i1 to i32
    %c0_i32_9 = arith.constant 0 : i32
    %12 = arith.cmpi ne, %11, %c0_i32_9 : i32
    scf.if %12 {
      %c0_10 = arith.constant 0 : index
      %c0_11 = arith.constant 0 : index
      %13 = vector.load %arg8[%c0_10, %c0_11] : memref<8x32xf32, #tpu.memory_space<vmem>>, vector<8x32xf32>
      %c0_12 = arith.constant 0 : index
      %c0_13 = arith.constant 0 : index
      %14 = vector.load %arg6[%c0_12, %c0_13] : memref<1x32xf32, #tpu.memory_space<vmem>>, vector<1x32xf32>
      %15 = vector.broadcast %14 : vector<1x32xf32> to vector<8x32xf32>
      %16 = arith.addf %13, %15 : vector<8x32xf32>
      %c0_14 = arith.constant 0 : index
      %c0_15 = arith.constant 0 : index
      %c0_16 = arith.constant 0 : index
      %17 = vector.load %arg7[%c0_14, %c0_15, %c0_16] : memref<1x8x32xf32, #tpu.memory_space<vmem>>, vector<1x8x32xf32>
      %18 = vector.shape_cast %17 : vector<1x8x32xf32> to vector<8x32xf32>
      %19 = vector.shape_cast %16 : vector<8x32xf32> to vector<1x8x32xf32>
      tpu.vector_store %arg7[%c0_14, %c0_15, %c0_16], %19 {strides = array<i32>} : memref<1x8x32xf32, #tpu.memory_space<vmem>>, vector<1x8x32xf32>,
    } else {
    }
    return
  }
  func.func @transform_0(%arg0: i32, %arg1: i32, %arg2: i32, %arg3: i32) -> (i32, i32, i32) {
    %c2_i32 = arith.constant 2 : i32
    %0 = arith.muli %arg0, %c2_i32 : i32
    %1 = arith.addi %0, %arg3 : i32
    %c0_i32 = arith.constant 0 : i32
    %c0_i32_0 = arith.constant 0 : i32
    return %1, %arg1, %c0_i32 : i32, i32, i32
  }
  func.func @transform_1(%arg0: i32, %arg1: i32, %arg2: i32, %arg3: i32) -> (i32, i32) {
    %c0_i32 = arith.constant 0 : i32
    return %arg3, %arg2 : i32, i32
  }
  func.func @transform_2(%arg0: i32, %arg1: i32, %arg2: i32, %arg3: i32) -> (i32, i32) {
    %c0_i32 = arith.constant 0 : i32
    %c0_i32_0 = arith.constant 0 : i32
    return %c0_i32, %arg2 : i32, i32
  }
  func.func @transform_3(%arg0: i32, %arg1: i32, %arg2: i32, %arg3: i32) -> (i32, i32, i32) {
    %c0_i32 = arith.constant 0 : i32
    return %arg0, %arg1, %arg2 : i32, i32, i32
  }
}

</mosaic_0001>

<llo_original>
// kernel: tpu_custom_call.1
$region0: #{tpu_custom_call.1}
  #allocation0 [shape = 'u32[]', space=smem, size = 0x4, offset = 0x4, fixed_abs, tag = 'smem constant byte address 0x4 - core index']
  #allocation1 [shape = 'u32[144,128]{1,0:T(1,128)}', space=vmem, size = 0x12000, scoped, tag = 'internal scratch']
  #allocation2 [shape = 'f32[8,32]{1,0:T(8,128)}', space=vmem, size = 0x1000, scoped, tag = 'scratch operand']
  %s0 = inlined_call_operand.hbm [shape: f32[4,8,16], index: 0, kind: input, shape index: {}]
  %s1 = inlined_call_operand.hbm [shape: f32[32,32], index: 1, kind: input, shape index: {}]
  %s2 = inlined_call_operand.vmem [shape: f32[1,32], index: 2, kind: input, shape index: {}]
  %s3 = inlined_call_operand.hbm [shape: f32[2,8,32], index: 3, kind: output, shape index: {}]
  %s4 = sld [smem:[#allocation0]]
  $region61: #{tpu_custom_call.1} parent=0
    _
  %s6 = ssub.s32 1, %s4
  %s7 = scalar_select 0, %s6, %s4
  $region1: #{tpu_custom_call.1} parent=0
    #allocation3 [shape = 'u8[8192]{0}', space=vmem, size = 0x2000, scoped, tag = 'input window, operand 0']
    #allocation4 [shape = 's32[2]{0}', space=sflag, size = 0x8, scoped, tag = 'scoped memory for tpu_custom_call.1']
    #allocation5 [shape = 's32[2]{0}', space=sflag, size = 0x8, scoped, tag = 'scoped memory for tpu_custom_call.1']
    #allocation6 [shape = 'u8[16384]{0}', space=vmem, size = 0x4000, scoped, tag = 'input window, operand 1']
    #allocation7 [shape = 's32[2]{0}', space=sflag, size = 0x8, scoped, tag = 'scoped memory for tpu_custom_call.1']
    #allocation8 [shape = 'u8[8192]{0}', space=vmem, size = 0x2000, scoped, tag = 'output window, operand 0']
    %8 = vsyncpa [#allocation4], 0
    %s9 = scalar_lea.sflag [#allocation4], 1
    %10 = vsyncpa %s9, 0
    %11 = vsyncpa [#allocation7], 0
    %s12 = scalar_lea.sflag [#allocation7], 1
    %13 = vsyncpa %s12, 0
    %14 = vsyncpa [#allocation5], 0
    %s15 = scalar_lea.sflag [#allocation5], 1
    %16 = vsyncpa %s15, 0
    loop: start=0, step=1, limit=6
    $region2: #{tpu_custom_call.1} parent=1 // loop_pre_header
      _
    $region3: #{tpu_custom_call.1} parent=1 // loop_header
      %s18 = sphi 0, %s22
      %p19 = scmp.ge.s32.totalorder %s18, 6
      %s25 = sphi 0, %s51
      %s26 = sphi 0, %s47
      %s27 = sphi 0, %s43
      %s28 = sphi 0, %s39
      %s29 = sphi 0, %s25
      %s30 = sphi 0, %s26
      %s31 = sphi 0, %s27
      %s32 = sphi 0, %s28
      %s33 = sphi 0, %s29
      %s34 = sphi 0, %s30
      %s35 = sphi 0, %s31
      %s36 = sphi 0, %s32
      %s60 = sphi 0, %s62
      %s63 = sphi 0, %s60
      %s64 = sphi 0, %s63
      %s80 = sphi 0, %s64
      %s88 = sphi 0, %s90
      %s91 = sphi 0, %s88
      %s92 = sphi 0, %s91
      %s108 = sphi 0, %s92
      %s114 = sphi 0, %s116
      %s117 = sphi 0, %s114
      %s118 = sphi 0, %s117
      %s134 = sphi 0, %s118
      %s144 = sphi 0, %s146
      %s147 = sphi 0, %s144
      %s148 = sphi 0, %s147
      %s164 = sphi 0, %s148
    $region4: #{tpu_custom_call.1} parent=1 // loop_header_branch
      %21 = sbr.rel (%p19) target = $region8
    $region5: #{tpu_custom_call.1} parent=1 // loop_body
      %s23 = ssub.s32 %s18, 1
      %s24 = ssub.s32 %s18, 2
      %s37 = sadd.s32 1, %s28
      %p38 = scmp.ge.s32.totalorder %s37, 2
      %s39 = scalar_select %p38, 0, %s37
      %s40 = sadd.s32 1, %s27
      %s41 = scalar_select %p38, %s40, %s27
      %p42 = scmp.ge.s32.totalorder %s41, 1
      %s43 = scalar_select %p42, 0, %s41
      %s44 = sadd.s32 1, %s26
      %s45 = scalar_select %p42, %s44, %s26
      %p46 = scmp.ge.s32.totalorder %s45, 1
      %s47 = scalar_select %p46, 0, %s45
      %s48 = sadd.s32 1, %s25
      %s49 = scalar_select %p46, %s48, %s25
      %p50 = scmp.ge.s32.totalorder %s49, 2
      %s51 = scalar_select %p50, 0, %s49
      %s52 = smul.u32 %s25, 2
      %s53 = sadd.s32 %s52, %s28
      %s54 = smul.u32 %s51, 2
      %s55 = sadd.s32 %s54, %s39
      %s56 = ssub.s32 %s53, %s55
      %s57 = ssub.s32 %s26, %s47
      %s58 = sor.u32 %s56, %s57
      %p59 = scmp.eq.s32.totalorder %s58, 0
      %s61 = sadd.s32 %s60, 1
      %s62 = scalar_select %p59, %s60, %s61
      %p65 = pneg %p59
      %p66 = scmp.eq.s32.totalorder %s18, 3
      %p67 = por %p65, %p66
      %p68 = scmp.ne.s32.totalorder %s60, %s63
      %p69 = scmp.eq.s32.totalorder %s18, 0
      %p70 = por %p68, %p69
      %p71 = scmp.ne.s32.totalorder %s60, %s63
      %p72 = scmp.eq.s32.totalorder %s23, 3
      %p73 = por %p71, %p72
      %p74 = scmp.ne.s32.totalorder %s63, %s64
      %p75 = scmp.eq.s32.totalorder %s23, 0
      %p76 = por %p74, %p75
      %p77 = scmp.ne.s32.totalorder %s63, %s64
      %p78 = scmp.eq.s32.totalorder %s24, 3
      %p79 = por %p77, %p78
      %p81 = scmp.ne.s32.totalorder %s64, %s80
      %p82 = scmp.eq.s32.totalorder %s24, 0
      %p83 = por %p81, %p82
      %s84 = ssub.s32 %s28, %s39
      %s85 = ssub.s32 %s27, %s43
      %s86 = sor.u32 %s84, %s85
      %p87 = scmp.eq.s32.totalorder %s86, 0
      %s89 = sadd.s32 %s88, 1
      %s90 = scalar_select %p87, %s88, %s89
      %p93 = pneg %p87
      %p94 = scmp.eq.s32.totalorder %s18, 3
      %p95 = por %p93, %p94
      %p96 = scmp.ne.s32.totalorder %s88, %s91
      %p97 = scmp.eq.s32.totalorder %s18, 0
      %p98 = por %p96, %p97
      %p99 = scmp.ne.s32.totalorder %s88, %s91
      %p100 = scmp.eq.s32.totalorder %s23, 3
      %p101 = por %p99, %p100
      %p102 = scmp.ne.s32.totalorder %s91, %s92
      %p103 = scmp.eq.s32.totalorder %s23, 0
      %p104 = por %p102, %p103
      %p105 = scmp.ne.s32.totalorder %s91, %s92
      %p106 = scmp.eq.s32.totalorder %s24, 3
      %p107 = por %p105, %p106
      %p109 = scmp.ne.s32.totalorder %s92, %s108
      %p110 = scmp.eq.s32.totalorder %s24, 0
      %p111 = por %p109, %p110
      %s112 = ssub.s32 %s27, %s43
      %p113 = scmp.eq.s32.totalorder %s112, 0
      %s115 = sadd.s32 %s114, 1
      %s116 = scalar_select %p113, %s114, %s115
      %p119 = pneg %p113
      %p120 = scmp.eq.s32.totalorder %s18, 3
      %p121 = por %p119, %p120
      %p122 = scmp.ne.s32.totalorder %s114, %s117
      %p123 = scmp.eq.s32.totalorder %s18, 0
      %p124 = por %p122, %p123
      %p125 = scmp.ne.s32.totalorder %s114, %s117
      %p126 = scmp.eq.s32.totalorder %s23, 3
      %p127 = por %p125, %p126
      %p128 = scmp.ne.s32.totalorder %s117, %s118
      %p129 = scmp.eq.s32.totalorder %s23, 0
      %p130 = por %p128, %p129
      %p131 = scmp.ne.s32.totalorder %s117, %s118
      %p132 = scmp.eq.s32.totalorder %s24, 3
      %p133 = por %p131, %p132
      %p135 = scmp.ne.s32.totalorder %s118, %s134
      %p136 = scmp.eq.s32.totalorder %s24, 0
      %p137 = por %p135, %p136
      %s138 = ssub.s32 %s25, %s51
      %s139 = ssub.s32 %s26, %s47
      %s140 = sor.u32 %s138, %s139
      %s141 = ssub.s32 %s27, %s43
      %s142 = sor.u32 %s140, %s141
      %p143 = scmp.eq.s32.totalorder %s142, 0
      %s145 = sadd.s32 %s144, 1
      %s146 = scalar_select %p143, %s144, %s145
      %p149 = pneg %p143
      %p150 = scmp.eq.s32.totalorder %s18, 3
      %p151 = por %p149, %p150
      %p152 = scmp.ne.s32.totalorder %s144, %s147
      %p153 = scmp.eq.s32.totalorder %s18, 0
      %p154 = por %p152, %p153
      %p155 = scmp.ne.s32.totalorder %s144, %s147
      %p156 = scmp.eq.s32.totalorder %s23, 3
      %p157 = por %p155, %p156
      %p158 = scmp.ne.s32.totalorder %s147, %s148
      %p159 = scmp.eq.s32.totalorder %s23, 0
      %p160 = por %p158, %p159
      %p161 = scmp.ne.s32.totalorder %s147, %s148
      %p162 = scmp.eq.s32.totalorder %s24, 3
      %p163 = por %p161, %p162
      %p165 = scmp.ne.s32.totalorder %s148, %s164
      %p166 = scmp.eq.s32.totalorder %s24, 0
      %p167 = por %p165, %p166
      %p168 = scmp.le.s32.totalorder 1, %s18
      %p169 = scmp.lt.s32.totalorder %s18, 5
      %p170 = pnand %p168, %p169
      %p171 = pneg %p170
      // Predicated region
      $region9: #{tpu_custom_call.1} parent=5 // pred_check
        _
      $region10: #{tpu_custom_call.1} parent=5 // pred_check_branch
        %173 = sbr.rel (%p170) target = $region12
      $region11: #{tpu_custom_call.1} parent=5 // pred_region
        %s174 = ssub.s32 %s18, 1
        // Predicated region
        $region13: #{tpu_custom_call.1} parent=11 // pred_check
          %p175 = pneg %p130
        $region14: #{tpu_custom_call.1} parent=11 // pred_check_branch
          %177 = sbr.rel (%p175) target = $region16
        $region15: #{tpu_custom_call.1} parent=11 // pred_region
          %p178 = scmp.lt.s32.totalorder %s31, 0
          %s179 = scalar_select %p178, %s31, 0
          %s180 = scalar_lea.vmem %s2, %s179
        $region16: #{tpu_custom_call.1} parent=11 // pred_fallthru
          _
      $region12: #{tpu_custom_call.1} parent=5 // pred_fallthru
        _
      %p181 = scmp.lt.s32.totalorder %s18, 4
      // Predicated region
      $region17: #{tpu_custom_call.1} parent=5 // pred_check
        %p182 = pneg %p181
      $region18: #{tpu_custom_call.1} parent=5 // pred_check_branch
        %184 = sbr.rel (%p182) target = $region20
      $region19: #{tpu_custom_call.1} parent=5 // pred_region
        // Predicated region
        $region21: #{tpu_custom_call.1} parent=19 // pred_check
          %p185 = pneg %p70
        $region22: #{tpu_custom_call.1} parent=19 // pred_check_branch
          %187 = sbr.rel (%p185) target = $region24
        $region23: #{tpu_custom_call.1} parent=19 // pred_region
          %s188 = sand.u32 %s60, 1
          %s189 = scalar_lea.sflag [#allocation4], %s188
          %s190 = sand.u32 %s60, 1
          %s191 = smul.addr %s190, 8
          %s192 = scalar_lea.vmem [#allocation3], %s191
          %s193 = smul.u32 %s25, 2
          %s194 = sadd.s32 %s193, %s28
          %s196 = ssub.s32 128, 128
          %197 = vsyncadd %s189, %s196
          %s198 = sadd.s32 %s26, %s194
          %s199 = smul.addr %s198, 128
          %s200 = scalar_lea.hbm %s0, %s199
          %s202 = sshll.u32 %s192, 4
          %s203 = int_to_ptr.vmem [resolvable:$true] %s202
          %205 = dma.hbm_to_vmem [thread:$0]  %s200, 128, %s203, %s189
        $region24: #{tpu_custom_call.1} parent=19 // pred_fallthru
          _
        // Predicated region
        $region25: #{tpu_custom_call.1} parent=19 // pred_check
          %p206 = pneg %p98
        $region26: #{tpu_custom_call.1} parent=19 // pred_check_branch
          %208 = sbr.rel (%p206) target = $region28
        $region27: #{tpu_custom_call.1} parent=19 // pred_region
          %s209 = sand.u32 %s88, 1
          %s210 = scalar_lea.sflag [#allocation7], %s209
          %s211 = sand.u32 %s88, 1
          %s212 = smul.addr %s211, 16
          %s213 = scalar_lea.vmem [#allocation6], %s212
          %s214 = smul.u32 2, %s28
          %s216 = ssub.s32 256, 256
          %217 = vsyncadd %s210, %s216
          %s218 = sadd.s32 %s27, %s214
          %s219 = smul.addr %s218, 128
          %s220 = scalar_lea.hbm %s1, %s219
          %s221 = sshll.u32 %s213, 4
          %s222 = int_to_ptr.vmem [resolvable:$true] %s221
          %227 = dma.hbm_to_vmem [thread:$0]  %s220, 256, %s222, %s210, 128, 128, 8
        $region28: #{tpu_custom_call.1} parent=19 // pred_fallthru
          _
      $region20: #{tpu_custom_call.1} parent=5 // pred_fallthru
        _
      %p228 = scmp.le.s32.totalorder 1, %s18
      %p229 = scmp.lt.s32.totalorder %s18, 5
      %p230 = pnand %p228, %p229
      %p231 = pneg %p230
      // Predicated region
      $region29: #{tpu_custom_call.1} parent=5 // pred_check
        _
      $region30: #{tpu_custom_call.1} parent=5 // pred_check_branch
        %233 = sbr.rel (%p230) target = $region32
      $region31: #{tpu_custom_call.1} parent=5 // pred_region
        %s234 = ssub.s32 %s18, 1
        %s235 = sand.u32 %s63, 1
        %s236 = scalar_lea.sflag [#allocation4], %s235
        %s237 = sand.u32 %s63, 1
        %s238 = smul.addr %s237, 8
        %s239 = scalar_lea.vmem [#allocation3], %s238
        // Predicated region
        $region33: #{tpu_custom_call.1} parent=31 // pred_check
          %p240 = pneg %p76
        $region34: #{tpu_custom_call.1} parent=31 // pred_check_branch
          %242 = sbr.rel (%p240) target = $region36
        $region35: #{tpu_custom_call.1} parent=31 // pred_region
          %243 = dma.done %s236, 128
        $region36: #{tpu_custom_call.1} parent=31 // pred_fallthru
          _
        %s244 = sand.u32 %s91, 1
        %s245 = scalar_lea.sflag [#allocation7], %s244
        %s246 = sand.u32 %s91, 1
        %s247 = smul.addr %s246, 16
        %s248 = scalar_lea.vmem [#allocation6], %s247
        // Predicated region
        $region37: #{tpu_custom_call.1} parent=31 // pred_check
          %p249 = pneg %p104
        $region38: #{tpu_custom_call.1} parent=31 // pred_check_branch
          %251 = sbr.rel (%p249) target = $region40
        $region39: #{tpu_custom_call.1} parent=31 // pred_region
          %252 = dma.done %s245, 256
        $region40: #{tpu_custom_call.1} parent=31 // pred_fallthru
          _
        %s253 = sand.u32 %s63, 1
        %s254 = scalar_lea.sflag [#allocation4], %s253
        %s255 = sand.u32 %s63, 1
        %s256 = smul.addr %s255, 8
        %s257 = scalar_lea.vmem [#allocation3], %s256
        %p258 = pneg %p76
        %p259 = pneg %p73
        %s260 = sand.u32 %s91, 1
        %s261 = scalar_lea.sflag [#allocation7], %s260
        %s262 = sand.u32 %s91, 1
        %s263 = smul.addr %s262, 16
        %s264 = scalar_lea.vmem [#allocation6], %s263
        %p265 = pneg %p104
        %p266 = pneg %p101
        %p267 = scmp.lt.s32.totalorder %s31, 0
        %s268 = scalar_select %p267, %s31, 0
        %s269 = scalar_lea.vmem %s2, %s268
        %p270 = pneg %p130
        %p271 = pneg %p127
        %p272 = pneg %p160
        %p273 = pneg %p157
        %s274 = sand.u32 %s147, 1
        %s275 = scalar_lea.sflag [#allocation5], %s274
        %s276 = sand.u32 %s147, 1
        %s277 = smul.addr %s276, 8
        %s278 = scalar_lea.vmem [#allocation8], %s277
        %s279 = smul.u32 %s29, 2
        %s280 = sadd.s32 %s279, %s32
        %s281 = smul.u32 2, %s32
        %p282 = scmp.lt.s32.totalorder %s31, 0
        %s283 = scalar_select %p282, %s31, 0
        %s284 = scalar_lea.vmem %s2, %s283
        %p285 = scmp.eq.s32.totalorder %s32, 0
        // Predicated region
        $region41: #{tpu_custom_call.1} parent=31 // pred_check
          %p286 = pneg %p285
        $region42: #{tpu_custom_call.1} parent=31 // pred_check_branch
          %288 = sbr.rel (%p286) target = $region44
        $region43: #{tpu_custom_call.1} parent=31 // pred_region
          %vm289 = vcmask 261120
          %290 = vst.msk [vmem:[#allocation2] sm:$0xff] %vm289, 0.0
        $region44: #{tpu_custom_call.1} parent=31 // pred_fallthru
          _
        %v291 = vld [vmem:[#allocation2] sm:$0xff]
        %v292 = vld [vmem:[%s239] sm:$0xff]
        %v293 = vld [vmem:[%s248] sm:$0xff]
        %v294 = vld [vmem:[%s248 + $0x8] sm:$0xff]
        %vm295 = vcmask 130048
        %v297 = vsel %vm295, %v292, 0
        %299 = vmatprep.subr.mxu0 0.0
        %300 = vmatpush1.msra.mxu0 0.0
        %301 = vmatprep.subr.mxu0 0.0
        %302 = vmatpush1.msra.mxu0 0.0
        %303 = vmatprep.subr.mxu0 0.0
        %304 = vmatpush1.msra.mxu0 0.0
        %305 = vmatprep.subr.mxu0 0.0
        %306 = vmatpush1.msra.mxu0 0.0
        %307 = vmatprep.subr.mxu0 0.0
        %308 = vmatpush1.msra.mxu0 0.0
        %309 = vmatprep.subr.mxu0 0.0
        %310 = vmatpush1.msra.mxu0 0.0
        %311 = vmatprep.subr.mxu0 0.0
        %312 = vmatpush1.msra.mxu0 0.0
        %313 = vmatprep.subr.mxu0 0.0
        %314 = vmatpush1.msra.mxu0 0.0
        %315 = vmatprep.subr.mxu0 0.0
        %316 = vmatpush1.msra.mxu0 0.0
        %317 = vmatprep.subr.mxu0 0.0
        %318 = vmatpush1.msra.mxu0 0.0
        %319 = vmatprep.subr.mxu0 0.0
        %320 = vmatpush1.msra.mxu0 0.0
        %321 = vmatprep.subr.mxu0 0.0
        %322 = vmatpush1.msra.mxu0 0.0
        %323 = vmatprep.subr.mxu0 0.0
        %324 = vmatpush1.msra.mxu0 0.0
        %325 = vmatprep.subr.mxu0 0.0
        %326 = vmatpush1.msra.mxu0 0.0
        %327 = vmatprep.subr.mxu0 0.0
        %328 = vmatpush1.msra.mxu0 %v294
        %329 = vmatprep.subr.mxu0 0.0
        %330 = vmatpush1.msra.mxu0 %v293
        %331 = vmatprep.subr.mxu0 0.0
        %332 = vmatpush2.msra.mxu0 0.0
        %333 = vmatprep.subr.mxu0 0.0
        %334 = vmatpush2.msra.mxu0 0.0
        %335 = vmatprep.subr.mxu0 0.0
        %336 = vmatpush2.msra.mxu0 0.0
        %337 = vmatprep.subr.mxu0 0.0
        %338 = vmatpush2.msra.mxu0 0.0
        %339 = vmatprep.subr.mxu0 0.0
        %340 = vmatpush2.msra.mxu0 0.0
        %341 = vmatprep.subr.mxu0 0.0
        %342 = vmatpush2.msra.mxu0 0.0
        %343 = vmatprep.subr.mxu0 0.0
        %344 = vmatpush2.msra.mxu0 0.0
        %345 = vmatprep.subr.mxu0 0.0
        %346 = vmatpush2.msra.mxu0 0.0
        %347 = vmatprep.subr.mxu0 0.0
        %348 = vmatpush2.msra.mxu0 0.0
        %349 = vmatprep.subr.mxu0 0.0
        %350 = vmatpush2.msra.mxu0 0.0
        %351 = vmatprep.subr.mxu0 0.0
        %352 = vmatpush2.msra.mxu0 0.0
        %353 = vmatprep.subr.mxu0 0.0
        %354 = vmatpush2.msra.mxu0 0.0
        %355 = vmatprep.subr.mxu0 0.0
        %356 = vmatpush2.msra.mxu0 0.0
        %357 = vmatprep.subr.mxu0 0.0
        %358 = vmatpush2.msra.mxu0 0.0
        %359 = vmatprep.subr.mxu0 0.0
        %360 = vmatpush2.msra.mxu0 0.0
        %361 = vmatprep.subr.mxu0 0.0
        %362 = vmatpush2.msra.mxu0 0.0
        %363 = vmatprep.mubr.f32.mxu0 0.0
        %364 = vmatmul.mubr.f32.gmra.mxu0 %v297
        %v365 = vpop.f32.mrf.mxu0
        %v366 = vadd.f32 0.0, %v365
        %v367 = vpop.f32.mrf.mxu0
        %368 = vdwg.mxu0
        %v369 = vadd.f32 %v291, %v366
        %vm370 = vcmask 261120
        %371 = vst.msk [vmem:[#allocation2] sm:$0xff] %vm370, %v369
        %p372 = scmp.eq.s32.totalorder %s32, 1
        // Predicated region
        $region45: #{tpu_custom_call.1} parent=31 // pred_check
          %p373 = pneg %p372
        $region46: #{tpu_custom_call.1} parent=31 // pred_check_branch
          %375 = sbr.rel (%p373) target = $region48
        $region47: #{tpu_custom_call.1} parent=31 // pred_region
          %v376 = vld [vmem:[#allocation2] sm:$0xff]
          %v377 = vld [vmem:[%s284] sm:$0x1]
          %v379 = vlaneseq
          %v380 = vshrl.u32 %v379, 7
          %v381 = vsub.s32 0, %v380
          %v382 = vrot.slane %v377, %v381
          %v384 = vadd.f32 %v376, %v382
          %385 = vst.msk [vmem:[%s278] sm:$0xff] %vm370, %v384
        $region48: #{tpu_custom_call.1} parent=31 // pred_fallthru
          _
        %s386 = sand.u32 %s147, 1
        %s387 = scalar_lea.sflag [#allocation5], %s386
        %s388 = sand.u32 %s147, 1
        %s389 = smul.addr %s388, 8
        %s390 = scalar_lea.vmem [#allocation8], %s389
        // Predicated region
        $region49: #{tpu_custom_call.1} parent=31 // pred_check
          %p391 = pneg %p157
        $region50: #{tpu_custom_call.1} parent=31 // pred_check_branch
          %393 = sbr.rel (%p391) target = $region52
        $region51: #{tpu_custom_call.1} parent=31 // pred_region
          %s395 = ssub.s32 128, 128
          %396 = vsyncadd %s387, %s395
          %s397 = sadd.s32 %s31, %s30
          %s398 = sadd.s32 %s397, %s29
          %s399 = smul.addr %s398, 128
          %s400 = scalar_lea.hbm %s3, %s399
          %s402 = sshll.u32 %s390, 4
          %s403 = int_to_ptr.vmem [resolvable:$true] %s402
          %405 = dma.vmem_to_hbm [thread:$0]  %s403, 128, %s400, %s387
        $region52: #{tpu_custom_call.1} parent=31 // pred_fallthru
          _
      $region32: #{tpu_custom_call.1} parent=5 // pred_fallthru
        _
      %p406 = scmp.le.s32.totalorder 2, %s18
      // Predicated region
      $region53: #{tpu_custom_call.1} parent=5 // pred_check
        %p407 = pneg %p406
      $region54: #{tpu_custom_call.1} parent=5 // pred_check_branch
        %409 = sbr.rel (%p407) target = $region56
      $region55: #{tpu_custom_call.1} parent=5 // pred_region
        %s410 = ssub.s32 %s18, 2
        // Predicated region
        $region57: #{tpu_custom_call.1} parent=55 // pred_check
          %p411 = pneg %p163
        $region58: #{tpu_custom_call.1} parent=55 // pred_check_branch
          %413 = sbr.rel (%p411) target = $region60
        $region59: #{tpu_custom_call.1} parent=55 // pred_region
          %s414 = sand.u32 %s148, 1
          %s415 = scalar_lea.sflag [#allocation5], %s414
          %s416 = sand.u32 %s148, 1
          %s417 = smul.addr %s416, 8
          %s418 = scalar_lea.vmem [#allocation8], %s417
          %419 = dma.done %s415, 128
        $region60: #{tpu_custom_call.1} parent=55 // pred_fallthru
          _
      $region56: #{tpu_custom_call.1} parent=5 // pred_fallthru
        _
    $region6: #{tpu_custom_call.1} parent=1 // loop_footer
      %s22 = sadd.s32 1, %s18
    $region7: #{tpu_custom_call.1} parent=1 // loop_footer_branch
      %17 = sbr.rel target = $region3
    $region8: #{tpu_custom_call.1} parent=1 // loop_exit
      _
    %420 = vsyncpa [#allocation4], 1
    %s421 = scalar_lea.sflag [#allocation4], 1
    %422 = vsyncpa %s421, 1
    %423 = vsyncpa [#allocation7], 1
    %s424 = scalar_lea.sflag [#allocation7], 1
    %425 = vsyncpa %s424, 1
    %426 = vsyncpa [#allocation5], 1
    %s427 = scalar_lea.sflag [#allocation5], 1
    %428 = vsyncpa %s427, 1

</llo_original>
